<compile_context>
chip_gen: v6e
topology: v6e:2x2x1
jax: 0.10.0
libtpu: 0.0.40
codegen_flags: <defaults>
</compile_context>

<pallas_src>
from functools import partial

import jax
import jax.numpy as jnp
from jax import lax
from jax.experimental import pallas as pl
from jax.experimental.pallas import tpu as pltpu


# --------------------------------------------------------------------------
# Kernel
# --------------------------------------------------------------------------
def attention_kernel(xf_ref, xq_ref, wq_ref, bq_ref, wkv_ref, bkv_ref,
                     out_ref, attn_ref, k_ref, v_ref):
    qi = pl.program_id(1)
    bb, S, D = xf_ref.shape
    tq = xq_ref.shape[1]
    D_pad = out_ref.shape[2]

    # ---- K / V projection: once per batch block, reused across query tiles.
    # xf block is constant across the inner axis (fetched once per batch blk).
    @pl.when(qi == 0)
    def _():
        # merge leading dims only (last dim intact -> no tile-crossing relayout)
        x2d = xf_ref[...].reshape(bb * S, D).astype(jnp.bfloat16)
        kv = jnp.dot(x2d, wkv_ref[...], preferred_element_type=jnp.float32)
        kv = (kv + bkv_ref[...]).astype(jnp.bfloat16)
        # 128-aligned lane slices (D_pad is a multiple of 128)
        k_ref[...] = kv[:, :D_pad].reshape(bb, S, D_pad)
        v_ref[...] = kv[:, D_pad:].reshape(bb, S, D_pad)

    # ---- Q projection for this query tile (1/sqrt(D) already folded in).
    xq = xq_ref[...].reshape(bb * tq, D).astype(jnp.bfloat16)
    q = jnp.dot(xq, wq_ref[...], preferred_element_type=jnp.float32)
    q = (q + bq_ref[...]).reshape(bb, tq, D_pad)

    # ---- scores (bb, tq, S): contract the feature dim, batched over bb.
    # Padded feature columns of q/k are exactly zero -> contribute nothing.
    s = lax.dot_general(
        q.astype(jnp.bfloat16), k_ref[...],
        dimension_numbers=(((2,), (2,)), ((0,), (0,))),
        preferred_element_type=jnp.float32)

    # ---- numerically-stable softmax over the key axis, all in f32.
    m = jnp.max(s, axis=-1, keepdims=True)
    e = jnp.exp(s - m)
    denom = jnp.sum(e, axis=-1, keepdims=True)
    # exact reciprocal: the RETURNED attention rows sum to 1 (review note);
    # it is one tiny (bb, tq, 1) op, not on the critical MXU path.
    attn = e * pl.reciprocal(denom, approx=False)

    # ---- attn @ V -> (bb, tq, D_pad), batched over bb.
    out = lax.dot_general(
        attn.astype(jnp.bfloat16), v_ref[...],
        dimension_numbers=(((2,), (1,)), ((0,), (0,))),
        preferred_element_type=jnp.float32)

    # D_pad is a multiple of 128 -> lane-dense stores for `out`.
    # (attn's last dim is S: lane-dense for any realistic S % 128 == 0;
    #  at toy S < 128 the masked tail store is negligible.)
    out_ref[...] = out.astype(out_ref.dtype)
    attn_ref[...] = attn.astype(attn_ref.dtype)


# --------------------------------------------------------------------------
# Shape / VMEM aware tiling helpers (all host-side, static under jit)
# --------------------------------------------------------------------------
def _round_up(x, m):
    return (x + m - 1) // m * m


def _chip_params():
    """(physical VMEM bytes per TensorCore, MXU M-dim target) for this chip."""
    vmem = 128 * 1024 * 1024          # v5e / v6e
    m_target = 256                    # v6e / v7x MXU is 256x256
    try:
        vmem = int(pltpu.get_tpu_info().vmem_capacity_bytes)
    except Exception:
        pass
    try:
        kind = jax.devices()[0].device_kind.lower()
        if "v7" in kind:
            vmem = min(vmem, 64 * 1024 * 1024)   # v7x: 64 MiB per TC
        if "v5 lite" in kind or "v5e" in kind or "v5lite" in kind:
            m_target = 128                        # v5e MXU is 128x128
    except Exception:
        pass
    return vmem, m_target


def _pick_query_tile(S, max_tq=256):
    """Query-tile length: full S when small, else a divisor of S (mult of 8)."""
    if S <= max_tq:
        return S
    for tq in range(max_tq, 7, -8):
        if S % tq == 0:
            return tq
    return S


def _vmem_estimate_bytes(bb, S, tq, D, D_pad, attn_bytes, out_bytes, x_bytes):
    """Rough per-step VMEM footprint (pipelined blocks + scratch + temps)."""
    xf_blk = bb * S * D * x_bytes
    xq_blk = bb * tq * D * x_bytes
    w_res = D * 3 * D_pad * 2 + 3 * D_pad * 4            # bf16 weights, f32 bias
    out_blk = bb * tq * D_pad * out_bytes
    attn_blk = bb * tq * S * attn_bytes
    pipelined = 2 * (xf_blk + xq_blk + w_res + out_blk + attn_blk)  # dbl-buffered
    kv_scratch = 2 * bb * S * D_pad * 2                    # K and V, bf16
    kv_temp = bb * S * 2 * D_pad * 4 + bb * S * D * 2      # K/V projection (qi==0)
    qt_temp = 2 * bb * tq * D_pad * 4 + 3 * bb * tq * S * 4  # q/out + s/e/attn f32
    return pipelined + kv_scratch + max(kv_temp, qt_temp)


def _pick_batch_block(B, S, tq, D, D_pad, attn_bytes, out_bytes, x_bytes,
                      budget, m_target):
    feasible = []
    for bb in range(1, B + 1):
        if B % bb:
            continue
        # keep >= 2 grid steps over the batch axis so the "parallel" dimension
        # can be sharded across v7x's two TensorCores (e.g. B=2 -> bb=1).
        if B >= 2 and B // bb < 2:
            continue
        if _vmem_estimate_bytes(bb, S, tq, D, D_pad, attn_bytes, out_bytes,
                                x_bytes) > budget:
            continue
        feasible.append(bb)
    if not feasible:
        return 1
    for bb in feasible:                 # smallest bb that reaches the MXU M target
        if bb * tq >= m_target:
            return bb
    return feasible[-1]                 # otherwise the largest that fits VMEM


# --------------------------------------------------------------------------
# Wrapper
# --------------------------------------------------------------------------
@partial(jax.jit, static_argnames=("attn_dtype",))
def attention_block(x, wq, bq, wk, bk, wv, bv, *, attn_dtype=jnp.bfloat16):
    B, S, D = x.shape
    D_pad = _round_up(D, 128)           # 128-aligned Q/K/V feature slots

    tq = _pick_query_tile(S)
    phys_vmem, m_target = _chip_params()
    budget = int(0.60 * phys_vmem)      # leave headroom under physical VMEM

    attn_bytes = jnp.dtype(attn_dtype).itemsize
    out_bytes = jnp.dtype(x.dtype).itemsize
    x_bytes = jnp.dtype(x.dtype).itemsize

    bb = _pick_batch_block(B, S, tq, D, D_pad, attn_bytes, out_bytes, x_bytes,
                           budget, m_target)
    est = _vmem_estimate_bytes(bb, S, tq, D, D_pad, attn_bytes, out_bytes,
                               x_bytes)
    vmem_limit = int(min(max(32 * 1024 * 1024, est * 1.25), 0.85 * phys_vmem))

    # Host-side weight prep (one-time, fused into XLA around the kernel):
    #  * nn.Linear computes x @ W.T + b, so pass W.T (pre-transposed).
    #  * fold the 1/sqrt(D) score scale into the query projection.
    #  * pad each projection's output features to D_pad (128 multiple) so the
    #    in-kernel slices and MXU N dims are lane aligned; pads are zero.
    # TODO(synk): for very large D (>= ~2048) the resident (D, 2*D_pad) weight
    # should be tiled over a K/N grid axis (and fp8 weights on v7x) instead of
    # being kept fully resident in VMEM.
    inv_scale = 1.0 / jnp.sqrt(jnp.float32(D))
    pad_w = lambda w: jnp.pad(w, ((0, 0), (0, D_pad - D)))
    pad_b = lambda b: jnp.pad(b, (0, D_pad - D))
    wq_t = pad_w((wq * inv_scale).T).astype(jnp.bfloat16)
    bq_r = pad_b(bq * inv_scale).reshape(1, D_pad).astype(jnp.float32)
    wkv_t = jnp.concatenate([pad_w(wk.T), pad_w(wv.T)], axis=1).astype(jnp.bfloat16)
    bkv_r = jnp.concatenate([pad_b(bk), pad_b(bv)]
                            ).reshape(1, 2 * D_pad).astype(jnp.float32)

    num_b = B // bb
    num_q = S // tq

    out_pad, attn = pl.pallas_call(
        attention_kernel,
        out_shape=(
            jax.ShapeDtypeStruct((B, S, D_pad), x.dtype),   # lane-dense (D_pad%128==0)
            jax.ShapeDtypeStruct((B, S, S), attn_dtype),    # bf16 halves the S^2 stream
        ),
        grid_spec=pltpu.PrefetchScalarGridSpec(
            num_scalar_prefetch=0,
            grid=(num_b, num_q),
            in_specs=[
                # full-sequence x block, resident across the query-tile axis (K/V)
                pl.BlockSpec((bb, S, D), lambda b, q: (b, 0, 0)),
                # query-tile x block
                pl.BlockSpec((bb, tq, D), lambda b, q: (b, q, 0)),
                pl.BlockSpec((D, D_pad), lambda b, q: (0, 0)),       # Wq (resident)
                pl.BlockSpec((1, D_pad), lambda b, q: (0, 0)),       # bq
                pl.BlockSpec((D, 2 * D_pad), lambda b, q: (0, 0)),   # W_kv (resident)
                pl.BlockSpec((1, 2 * D_pad), lambda b, q: (0, 0)),   # b_kv
            ],
            out_specs=[
                pl.BlockSpec((bb, tq, D_pad), lambda b, q: (b, q, 0)),
                pl.BlockSpec((bb, tq, S), lambda b, q: (b, q, 0)),
            ],
            scratch_shapes=[
                pltpu.VMEM((bb, S, D_pad), jnp.bfloat16),   # K (per batch block)
                pltpu.VMEM((bb, S, D_pad), jnp.bfloat16),   # V (per batch block)
            ],
        ),
        compiler_params=pltpu.CompilerParams(
            # batch axis independent -> parallel (megacore); query-tile axis
            # reuses the K/V scratch computed at qi == 0 -> arbitrary.
            dimension_semantics=("parallel", "arbitrary"),
            vmem_limit_bytes=vmem_limit,
        ),
    )(x, x, wq_t, bq_r, wkv_t, bkv_r)

    out = out_pad[:, :, :D] if D_pad != D else out_pad   # drop zero padding (free)
    return out, attn


# --------------------------------------------------------------------------
# Reference + test
# --------------------------------------------------------------------------
def _reference(x, wq, bq, wk, bk, wv, bv):
    q = x @ wq.T + bq
    k = x @ wk.T + bk
    v = x @ wv.T + bv
    s = jnp.einsum("bqd,bkd->bqk", q, k) / jnp.sqrt(jnp.float32(x.shape[-1]))
    a = jax.nn.softmax(s, axis=-1)
    o = jnp.einsum("bqk,bkd->bqd", a, v)
    return o, a


if __name__ == "__main__":
    B, S, D = 2, 8, 32  # batch, seq, input_dim

    key = jax.random.PRNGKey(0)
    kx, kwq, kbq, kwk, kbk, kwv, kbv = jax.random.split(key, 7)

    x = jax.random.normal(kx, (B, S, D), dtype=jnp.float32)
    # deterministic synthetic params (nn.Linear(input_dim, input_dim) shapes)
    wq = jax.random.normal(kwq, (D, D), dtype=jnp.float32) * 0.1
    bq = jax.random.normal(kbq, (D,), dtype=jnp.float32) * 0.1
    wk = jax.random.normal(kwk, (D, D), dtype=jnp.float32) * 0.1
    bk = jax.random.normal(kbk, (D,), dtype=jnp.float32) * 0.1
    wv = jax.random.normal(kwv, (D, D), dtype=jnp.float32) * 0.1
    bv = jax.random.normal(kbv, (D,), dtype=jnp.float32) * 0.1

    out, attn = attention_block(x, wq, bq, wk, bk, wv, bv)
    out, attn = jax.block_until_ready((out, attn))

    ref_out, ref_attn = _reference(x, wq, bq, wk, bk, wv, bv)
    # bf16 MXU operands (f32 accumulation) + bf16 attention output
    # => compare at bf16-level tolerance.
    assert out.shape == (B, S, D) and attn.shape == (B, S, S)
    assert jnp.allclose(out, ref_out, atol=2e-2, rtol=2e-2)
    assert jnp.allclose(attn.astype(jnp.float32), ref_attn, atol=2e-2, rtol=2e-2)

    print("KERNEL_OK")
</pallas_src>

<mosaic_0001>
module attributes {stable_mosaic.version = 11 : i64} {
  func.func @attention_kernel(%arg0: i32, %arg1: i32, %arg2: memref<1x8x32xf32, #tpu.memory_space<vmem>>, %arg3: memref<1x8x32xf32, #tpu.memory_space<vmem>>, %arg4: memref<32x128xbf16, #tpu.memory_space<vmem>>, %arg5: memref<1x128xf32, #tpu.memory_space<vmem>>, %arg6: memref<32x256xbf16, #tpu.memory_space<vmem>>, %arg7: memref<1x256xf32, #tpu.memory_space<vmem>>, %arg8: memref<1x8x128xf32, #tpu.memory_space<vmem>>, %arg9: memref<1x8x8xbf16, #tpu.memory_space<vmem>>, %arg10: memref<1x8x128xbf16, #tpu.memory_space<vmem>>, %arg11: memref<1x8x128xbf16, #tpu.memory_space<vmem>>) attributes {dimension_semantics = [#tpu.dimension_semantics<parallel>, #tpu.dimension_semantics<arbitrary>], iteration_bounds = array<i64: 2, 1>, scalar_prefetch = 0 : i64, scratch_operands = 2 : i64, tpu.core_type = #tpu.core_type<tc>, window_params = [{transform_indices = @transform_0, window_bounds = array<i64: 1, 8, 32>}, {transform_indices = @transform_1, window_bounds = array<i64: 1, 8, 32>}, {pipeline_mode = #tpu.pipeline_mode<synchronous>, transform_indices = @transform_2, window_bounds = array<i64: 32, 128>}, {pipeline_mode = #tpu.pipeline_mode<synchronous>, transform_indices = @transform_3, window_bounds = array<i64: 1, 128>}, {pipeline_mode = #tpu.pipeline_mode<synchronous>, transform_indices = @transform_4, window_bounds = array<i64: 32, 256>}, {pipeline_mode = #tpu.pipeline_mode<synchronous>, transform_indices = @transform_5, window_bounds = array<i64: 1, 256>}, {transform_indices = @transform_6, window_bounds = array<i64: 1, 8, 128>}, {transform_indices = @transform_7, window_bounds = array<i64: 1, 8, 8>}]} {
    %c0_i32 = arith.constant 0 : i32
    %0 = arith.cmpi eq, %arg1, %c0_i32 : i32
    %1 = arith.extui %0 : i1 to i32
    %c0_i32_0 = arith.constant 0 : i32
    %2 = arith.cmpi ne, %1, %c0_i32_0 : i32
    scf.if %2 {
      %c0_23 = arith.constant 0 : index
      %c0_24 = arith.constant 0 : index
      %c0_25 = arith.constant 0 : index
      %31 = vector.load %arg2[%c0_23, %c0_24, %c0_25] : memref<1x8x32xf32, #tpu.memory_space<vmem>>, vector<1x8x32xf32>
      %32 = vector.shape_cast %31 : vector<1x8x32xf32> to vector<8x32xf32>
      %33 = arith.truncf %32 : vector<8x32xf32> to vector<8x32xbf16>
      %c0_26 = arith.constant 0 : index
      %c0_27 = arith.constant 0 : index
      %34 = vector.load %arg6[%c0_26, %c0_27] : memref<32x256xbf16, #tpu.memory_space<vmem>>, vector<32x256xbf16>
      %cst_28 = arith.constant dense<0.000000e+00> : vector<8x256xf32>
      %35 = tpu.matmul %33, %34, %cst_28 {dimension_numbers = #tpu.dot_dimension_numbers<[1], [0], [0], [1], [0, 0, 1, 1], [], []>} : vector<8x32xbf16>, vector<32x256xbf16>, vector<8x256xf32> -> vector<8x256xf32>
      %c0_29 = arith.constant 0 : index
      %c0_30 = arith.constant 0 : index
      %36 = vector.load %arg7[%c0_29, %c0_30] : memref<1x256xf32, #tpu.memory_space<vmem>>, vector<1x256xf32>
      %37 = vector.broadcast %36 : vector<1x256xf32> to vector<8x256xf32>
      %38 = arith.addf %35, %37 : vector<8x256xf32>
      %39 = arith.truncf %38 : vector<8x256xf32> to vector<8x256xbf16>
      %40 = vector.extract_strided_slice %39 {offsets = [0, 0], sizes = [8, 128], strides = [1, 1]} : vector<8x256xbf16> to vector<8x128xbf16>
      %41 = vector.shape_cast %40 : vector<8x128xbf16> to vector<1x8x128xbf16>
      %c0_31 = arith.constant 0 : index
      %c0_32 = arith.constant 0 : index
      %c0_33 = arith.constant 0 : index
      %42 = vector.load %arg10[%c0_31, %c0_32, %c0_33] : memref<1x8x128xbf16, #tpu.memory_space<vmem>>, vector<1x8x128xbf16>
      tpu.vector_store %arg10[%c0_31, %c0_32, %c0_33], %41 {strides = array<i32>} : memref<1x8x128xbf16, #tpu.memory_space<vmem>>, vector<1x8x128xbf16>,
      %43 = vector.extract_strided_slice %39 {offsets = [0, 128], sizes = [8, 128], strides = [1, 1]} : vector<8x256xbf16> to vector<8x128xbf16>
      %44 = vector.shape_cast %43 : vector<8x128xbf16> to vector<1x8x128xbf16>
      %c0_34 = arith.constant 0 : index
      %c0_35 = arith.constant 0 : index
      %c0_36 = arith.constant 0 : index
      %45 = vector.load %arg11[%c0_34, %c0_35, %c0_36] : memref<1x8x128xbf16, #tpu.memory_space<vmem>>, vector<1x8x128xbf16>
      tpu.vector_store %arg11[%c0_34, %c0_35, %c0_36], %44 {strides = array<i32>} : memref<1x8x128xbf16, #tpu.memory_space<vmem>>, vector<1x8x128xbf16>,
    } else {
    }
    %c0 = arith.constant 0 : index
    %c0_1 = arith.constant 0 : index
    %c0_2 = arith.constant 0 : index
    %3 = vector.load %arg3[%c0, %c0_1, %c0_2] : memref<1x8x32xf32, #tpu.memory_space<vmem>>, vector<1x8x32xf32>
    %4 = vector.shape_cast %3 : vector<1x8x32xf32> to vector<8x32xf32>
    %5 = arith.truncf %4 : vector<8x32xf32> to vector<8x32xbf16>
    %c0_3 = arith.constant 0 : index
    %c0_4 = arith.constant 0 : index
    %6 = vector.load %arg4[%c0_3, %c0_4] : memref<32x128xbf16, #tpu.memory_space<vmem>>, vector<32x128xbf16>
    %cst = arith.constant dense<0.000000e+00> : vector<8x128xf32>
    %7 = tpu.matmul %5, %6, %cst {dimension_numbers = #tpu.dot_dimension_numbers<[1], [0], [0], [1], [0, 0, 1, 1], [], []>} : vector<8x32xbf16>, vector<32x128xbf16>, vector<8x128xf32> -> vector<8x128xf32>
    %c0_5 = arith.constant 0 : index
    %c0_6 = arith.constant 0 : index
    %8 = vector.load %arg5[%c0_5, %c0_6] : memref<1x128xf32, #tpu.memory_space<vmem>>, vector<1x128xf32>
    %9 = vector.broadcast %8 : vector<1x128xf32> to vector<8x128xf32>
    %10 = arith.addf %7, %9 : vector<8x128xf32>
    %11 = vector.shape_cast %10 : vector<8x128xf32> to vector<1x8x128xf32>
    %12 = arith.truncf %11 : vector<1x8x128xf32> to vector<1x8x128xbf16>
    %c0_7 = arith.constant 0 : index
    %c0_8 = arith.constant 0 : index
    %c0_9 = arith.constant 0 : index
    %13 = vector.load %arg10[%c0_7, %c0_8, %c0_9] : memref<1x8x128xbf16, #tpu.memory_space<vmem>>, vector<1x8x128xbf16>
    %cst_10 = arith.constant dense<0.000000e+00> : vector<1x8x8xf32>
    %14 = tpu.matmul %12, %13, %cst_10 {dimension_numbers = #tpu.dot_dimension_numbers<[2], [2], [1], [1], [0, 0, 0, 1, 1, 1], [0], [0]>} : vector<1x8x128xbf16>, vector<1x8x128xbf16>, vector<1x8x8xf32> -> vector<1x8x8xf32>
    %cst_11 = arith.constant dense<0xFF800000> : vector<1x8xf32>
    %15 = vector.multi_reduction <maximumf>, %14, %cst_11 [2] : vector<1x8x8xf32> to vector<1x8xf32>
    %16 = vector.shape_cast %15 : vector<1x8xf32> to vector<1x8x1xf32>
    %17 = vector.broadcast %16 : vector<1x8x1xf32> to vector<1x8x8xf32>
    %18 = arith.subf %14, %17 : vector<1x8x8xf32>
    %19 = math.exp %18 : vector<1x8x8xf32>
    %cst_12 = arith.constant dense<0.000000e+00> : vector<1x8xf32>
    %20 = vector.multi_reduction <add>, %19, %cst_12 [2] : vector<1x8x8xf32> to vector<1x8xf32>
    %21 = vector.shape_cast %20 : vector<1x8xf32> to vector<1x8x1xf32>
    %22 = tpu.reciprocal %21 : vector<1x8x1xf32> -> vector<1x8x1xf32>
    %23 = vector.broadcast %22 : vector<1x8x1xf32> to vector<1x8x8xf32>
    %24 = arith.mulf %19, %23 : vector<1x8x8xf32>
    %25 = arith.truncf %24 : vector<1x8x8xf32> to vector<1x8x8xbf16>
    %c0_13 = arith.constant 0 : index
    %c0_14 = arith.constant 0 : index
    %c0_15 = arith.constant 0 : index
    %26 = vector.load %arg11[%c0_13, %c0_14, %c0_15] : memref<1x8x128xbf16, #tpu.memory_space<vmem>>, vector<1x8x128xbf16>
    %cst_16 = arith.constant dense<0.000000e+00> : vector<1x8x128xf32>
    %27 = tpu.matmul %25, %26, %cst_16 {dimension_numbers = #tpu.dot_dimension_numbers<[2], [1], [1], [2], [0, 0, 0, 1, 1, 2], [0], [0]>} : vector<1x8x8xbf16>, vector<1x8x128xbf16>, vector<1x8x128xf32> -> vector<1x8x128xf32>
    %c0_17 = arith.constant 0 : index
    %c0_18 = arith.constant 0 : index
    %c0_19 = arith.constant 0 : index
    %28 = vector.load %arg8[%c0_17, %c0_18, %c0_19] : memref<1x8x128xf32, #tpu.memory_space<vmem>>, vector<1x8x128xf32>
    tpu.vector_store %arg8[%c0_17, %c0_18, %c0_19], %27 {strides = array<i32>} : memref<1x8x128xf32, #tpu.memory_space<vmem>>, vector<1x8x128xf32>,
    %29 = arith.truncf %24 : vector<1x8x8xf32> to vector<1x8x8xbf16>
    %c0_20 = arith.constant 0 : index
    %c0_21 = arith.constant 0 : index
    %c0_22 = arith.constant 0 : index
    %30 = vector.load %arg9[%c0_20, %c0_21, %c0_22] : memref<1x8x8xbf16, #tpu.memory_space<vmem>>, vector<1x8x8xbf16>
    tpu.vector_store %arg9[%c0_20, %c0_21, %c0_22], %29 {strides = array<i32>} : memref<1x8x8xbf16, #tpu.memory_space<vmem>>, vector<1x8x8xbf16>,
    return
  }
  func.func @transform_0(%arg0: i32, %arg1: i32) -> (i32, i32, i32) {
    %c0_i32 = arith.constant 0 : i32
    %c0_i32_0 = arith.constant 0 : i32
    %c0_i32_1 = arith.constant 0 : i32
    return %arg0, %c0_i32, %c0_i32_0 : i32, i32, i32
  }
  func.func @transform_1(%arg0: i32, %arg1: i32) -> (i32, i32, i32) {
    %c0_i32 = arith.constant 0 : i32
    %c0_i32_0 = arith.constant 0 : i32
    return %arg0, %arg1, %c0_i32 : i32, i32, i32
  }
  func.func @transform_2(%arg0: i32, %arg1: i32) -> (i32, i32) {
    %c0_i32 = arith.constant 0 : i32
    %c0_i32_0 = arith.constant 0 : i32
    %c0_i32_1 = arith.constant 0 : i32
    return %c0_i32, %c0_i32_0 : i32, i32
  }
  func.func @transform_3(%arg0: i32, %arg1: i32) -> (i32, i32) {
    %c0_i32 = arith.constant 0 : i32
    %c0_i32_0 = arith.constant 0 : i32
    %c0_i32_1 = arith.constant 0 : i32
    return %c0_i32, %c0_i32_0 : i32, i32
  }
  func.func @transform_4(%arg0: i32, %arg1: i32) -> (i32, i32) {
    %c0_i32 = arith.constant 0 : i32
    %c0_i32_0 = arith.constant 0 : i32
    %c0_i32_1 = arith.constant 0 : i32
    return %c0_i32, %c0_i32_0 : i32, i32
  }
  func.func @transform_5(%arg0: i32, %arg1: i32) -> (i32, i32) {
    %c0_i32 = arith.constant 0 : i32
    %c0_i32_0 = arith.constant 0 : i32
    %c0_i32_1 = arith.constant 0 : i32
    return %c0_i32, %c0_i32_0 : i32, i32
  }
  func.func @transform_6(%arg0: i32, %arg1: i32) -> (i32, i32, i32) {
    %c0_i32 = arith.constant 0 : i32
    %c0_i32_0 = arith.constant 0 : i32
    return %arg0, %arg1, %c0_i32 : i32, i32, i32
  }
  func.func @transform_7(%arg0: i32, %arg1: i32) -> (i32, i32, i32) {
    %c0_i32 = arith.constant 0 : i32
    %c0_i32_0 = arith.constant 0 : i32
    return %arg0, %arg1, %c0_i32 : i32, i32, i32
  }
}

</mosaic_0001>

<llo_original>
// kernel: attention_block.1
$region0: #{attention_block.1}
  #allocation0 [shape = 'u32[]', space=smem, size = 0x4, offset = 0x4, fixed_abs, tag = 'smem constant byte address 0x4 - core index']
  #allocation1 [shape = 'u32[144,128]{1,0:T(1,128)}', space=vmem, size = 0x12000, scoped, tag = 'internal scratch']
  #allocation2 [shape = 'bf16[1,8,128]{2,1,0:T(8,128)(2,1)}', space=vmem, size = 0x800, scoped, tag = 'scratch operand']
  #allocation3 [shape = 'bf16[1,8,128]{2,1,0:T(8,128)(2,1)}', space=vmem, size = 0x800, scoped, tag = 'scratch operand']
  %s0 = inlined_call_operand.vmem [shape: f32[2,8,32], index: 0, kind: input, shape index: {}, may-alias: {0,1}]
  %s1 = inlined_call_operand.vmem [shape: f32[2,8,32], index: 1, kind: input, shape index: {}, may-alias: {0,1}]
  %s2 = inlined_call_operand.vmem [shape: bf16[32,128], index: 2, kind: input, shape index: {}]
  %s3 = inlined_call_operand.vmem [shape: f32[1,128], index: 3, kind: input, shape index: {}]
  %s4 = inlined_call_operand.vmem [shape: bf16[32,256], index: 4, kind: input, shape index: {}]
  %s5 = inlined_call_operand.vmem [shape: f32[1,256], index: 5, kind: input, shape index: {}]
  %s6 = inlined_call_operand.hbm [shape: f32[2,8,128], index: 6, kind: output, shape index: {0}]
  %s7 = inlined_call_operand.hbm [shape: bf16[2,8,8], index: 7, kind: output, shape index: {1}]
  %8 = xla_tuple %s6, %s7
  %s9 = sld [smem:[#allocation0]]
  $region69: #{attention_block.1} parent=0
    _
  %s11 = ssub.s32 1, %s9
  %s12 = scalar_select 0, %s11, %s9
  $region1: #{attention_block.1} parent=0
    #allocation4 [shape = 'u8[8192]{0}', space=vmem, size = 0x2000, scoped, tag = 'output window, operand 0']
    #allocation5 [shape = 's32[2]{0}', space=sflag, size = 0x8, scoped, tag = 'scoped memory for attention_block.1']
    #allocation6 [shape = 'u8[4096]{0}', space=vmem, size = 0x1000, scoped, tag = 'output window, operand 1']
    #allocation7 [shape = 's32[2]{0}', space=sflag, size = 0x8, scoped, tag = 'scoped memory for attention_block.1']
    %13 = vsyncpa [#allocation5], 0
    %s14 = scalar_lea.sflag [#allocation5], 1
    %15 = vsyncpa %s14, 0
    %16 = vsyncpa [#allocation7], 0
    %s17 = scalar_lea.sflag [#allocation7], 1
    %18 = vsyncpa %s17, 0
    loop: start=0, step=1, limit=4
    $region2: #{attention_block.1} parent=1 // loop_pre_header
      _
    $region3: #{attention_block.1} parent=1 // loop_header
      %s20 = sphi 0, %s24
      %p21 = scmp.ge.s32.totalorder %s20, 4
      %s27 = sphi 0, %s39
      %s28 = sphi 0, %s35
      %s29 = sphi 0, %s27
      %s30 = sphi 0, %s28
      %s31 = sphi 0, %s29
      %s32 = sphi 0, %s30
      %s42 = sphi 0, %s44
      %s45 = sphi 0, %s42
      %s46 = sphi 0, %s45
      %s62 = sphi 0, %s46
      %s70 = sphi 0, %s72
      %s73 = sphi 0, %s70
      %s74 = sphi 0, %s73
      %s90 = sphi 0, %s74
      %s94 = sphi 0, %s94
      %s96 = sphi 0, %s94
      %s97 = sphi 0, %s96
      %s111 = sphi 0, %s97
      %s115 = sphi 0, %s115
      %s117 = sphi 0, %s115
      %s118 = sphi 0, %s117
      %s132 = sphi 0, %s118
      %s136 = sphi 0, %s136
      %s138 = sphi 0, %s136
      %s139 = sphi 0, %s138
      %s153 = sphi 0, %s139
      %s157 = sphi 0, %s157
      %s159 = sphi 0, %s157
      %s160 = sphi 0, %s159
      %s174 = sphi 0, %s160
      %s182 = sphi 0, %s184
      %s185 = sphi 0, %s182
      %s186 = sphi 0, %s185
      %s202 = sphi 0, %s186
      %s210 = sphi 0, %s212
      %s213 = sphi 0, %s210
      %s214 = sphi 0, %s213
      %s230 = sphi 0, %s214
    $region4: #{attention_block.1} parent=1 // loop_header_branch
      %23 = sbr.rel (%p21) target = $region8
    $region5: #{attention_block.1} parent=1 // loop_body
      %s25 = ssub.s32 %s20, 1
      %s26 = ssub.s32 %s20, 2
      %s33 = sadd.s32 1, %s28
      %p34 = scmp.ge.s32.totalorder %s33, 1
      %s35 = scalar_select %p34, 0, %s33
      %s36 = sadd.s32 1, %s27
      %s37 = scalar_select %p34, %s36, %s27
      %p38 = scmp.ge.s32.totalorder %s37, 2
      %s39 = scalar_select %p38, 0, %s37
      %s40 = ssub.s32 %s27, %s39
      %p41 = scmp.eq.s32.totalorder %s40, 0
      %s43 = sadd.s32 %s42, 1
      %s44 = scalar_select %p41, %s42, %s43
      %p47 = pneg %p41
      %p48 = scmp.eq.s32.totalorder %s20, 1
      %p49 = por %p47, %p48
      %p50 = scmp.ne.s32.totalorder %s42, %s45
      %p51 = scmp.eq.s32.totalorder %s20, 0
      %p52 = por %p50, %p51
      %p53 = scmp.ne.s32.totalorder %s42, %s45
      %p54 = scmp.eq.s32.totalorder %s25, 1
      %p55 = por %p53, %p54
      %p56 = scmp.ne.s32.totalorder %s45, %s46
      %p57 = scmp.eq.s32.totalorder %s25, 0
      %p58 = por %p56, %p57
      %p59 = scmp.ne.s32.totalorder %s45, %s46
      %p60 = scmp.eq.s32.totalorder %s26, 1
      %p61 = por %p59, %p60
      %p63 = scmp.ne.s32.totalorder %s46, %s62
      %p64 = scmp.eq.s32.totalorder %s26, 0
      %p65 = por %p63, %p64
      %s66 = ssub.s32 %s27, %s39
      %s67 = ssub.s32 %s28, %s35
      %s68 = sor.u32 %s66, %s67
      %p69 = scmp.eq.s32.totalorder %s68, 0
      %s71 = sadd.s32 %s70, 1
      %s72 = scalar_select %p69, %s70, %s71
      %p75 = pneg %p69
      %p76 = scmp.eq.s32.totalorder %s20, 1
      %p77 = por %p75, %p76
      %p78 = scmp.ne.s32.totalorder %s70, %s73
      %p79 = scmp.eq.s32.totalorder %s20, 0
      %p80 = por %p78, %p79
      %p81 = scmp.ne.s32.totalorder %s70, %s73
      %p82 = scmp.eq.s32.totalorder %s25, 1
      %p83 = por %p81, %p82
      %p84 = scmp.ne.s32.totalorder %s73, %s74
      %p85 = scmp.eq.s32.totalorder %s25, 0
      %p86 = por %p84, %p85
      %p87 = scmp.ne.s32.totalorder %s73, %s74
      %p88 = scmp.eq.s32.totalorder %s26, 1
      %p89 = por %p87, %p88
      %p91 = scmp.ne.s32.totalorder %s74, %s90
      %p92 = scmp.eq.s32.totalorder %s26, 0
      %p93 = por %p91, %p92
      %s95 = sadd.s32 %s94, 1
      %p98 = scmp.eq.s32.totalorder %s20, 1
      %p99 = scmp.ne.s32.totalorder %s94, %s96
      %p100 = scmp.eq.s32.totalorder %s20, 0
      %p101 = por %p99, %p100
      %p102 = scmp.ne.s32.totalorder %s94, %s96
      %p103 = scmp.eq.s32.totalorder %s25, 1
      %p104 = por %p102, %p103
      %p105 = scmp.ne.s32.totalorder %s96, %s97
      %p106 = scmp.eq.s32.totalorder %s25, 0
      %p107 = por %p105, %p106
      %p108 = scmp.ne.s32.totalorder %s96, %s97
      %p109 = scmp.eq.s32.totalorder %s26, 1
      %p110 = por %p108, %p109
      %p112 = scmp.ne.s32.totalorder %s97, %s111
      %p113 = scmp.eq.s32.totalorder %s26, 0
      %p114 = por %p112, %p113
      %s116 = sadd.s32 %s115, 1
      %p119 = scmp.eq.s32.totalorder %s20, 1
      %p120 = scmp.ne.s32.totalorder %s115, %s117
      %p121 = scmp.eq.s32.totalorder %s20, 0
      %p122 = por %p120, %p121
      %p123 = scmp.ne.s32.totalorder %s115, %s117
      %p124 = scmp.eq.s32.totalorder %s25, 1
      %p125 = por %p123, %p124
      %p126 = scmp.ne.s32.totalorder %s117, %s118
      %p127 = scmp.eq.s32.totalorder %s25, 0
      %p128 = por %p126, %p127
      %p129 = scmp.ne.s32.totalorder %s117, %s118
      %p130 = scmp.eq.s32.totalorder %s26, 1
      %p131 = por %p129, %p130
      %p133 = scmp.ne.s32.totalorder %s118, %s132
      %p134 = scmp.eq.s32.totalorder %s26, 0
      %p135 = por %p133, %p134
      %s137 = sadd.s32 %s136, 1
      %p140 = scmp.eq.s32.totalorder %s20, 1
      %p141 = scmp.ne.s32.totalorder %s136, %s138
      %p142 = scmp.eq.s32.totalorder %s20, 0
      %p143 = por %p141, %p142
      %p144 = scmp.ne.s32.totalorder %s136, %s138
      %p145 = scmp.eq.s32.totalorder %s25, 1
      %p146 = por %p144, %p145
      %p147 = scmp.ne.s32.totalorder %s138, %s139
      %p148 = scmp.eq.s32.totalorder %s25, 0
      %p149 = por %p147, %p148
      %p150 = scmp.ne.s32.totalorder %s138, %s139
      %p151 = scmp.eq.s32.totalorder %s26, 1
      %p152 = por %p150, %p151
      %p154 = scmp.ne.s32.totalorder %s139, %s153
      %p155 = scmp.eq.s32.totalorder %s26, 0
      %p156 = por %p154, %p155
      %s158 = sadd.s32 %s157, 1
      %p161 = scmp.eq.s32.totalorder %s20, 1
      %p162 = scmp.ne.s32.totalorder %s157, %s159
      %p163 = scmp.eq.s32.totalorder %s20, 0
      %p164 = por %p162, %p163
      %p165 = scmp.ne.s32.totalorder %s157, %s159
      %p166 = scmp.eq.s32.totalorder %s25, 1
      %p167 = por %p165, %p166
      %p168 = scmp.ne.s32.totalorder %s159, %s160
      %p169 = scmp.eq.s32.totalorder %s25, 0
      %p170 = por %p168, %p169
      %p171 = scmp.ne.s32.totalorder %s159, %s160
      %p172 = scmp.eq.s32.totalorder %s26, 1
      %p173 = por %p171, %p172
      %p175 = scmp.ne.s32.totalorder %s160, %s174
      %p176 = scmp.eq.s32.totalorder %s26, 0
      %p177 = por %p175, %p176
      %s178 = ssub.s32 %s27, %s39
      %s179 = ssub.s32 %s28, %s35
      %s180 = sor.u32 %s178, %s179
      %p181 = scmp.eq.s32.totalorder %s180, 0
      %s183 = sadd.s32 %s182, 1
      %s184 = scalar_select %p181, %s182, %s183
      %p187 = pneg %p181
      %p188 = scmp.eq.s32.totalorder %s20, 1
      %p189 = por %p187, %p188
      %p190 = scmp.ne.s32.totalorder %s182, %s185
      %p191 = scmp.eq.s32.totalorder %s20, 0
      %p192 = por %p190, %p191
      %p193 = scmp.ne.s32.totalorder %s182, %s185
      %p194 = scmp.eq.s32.totalorder %s25, 1
      %p195 = por %p193, %p194
      %p196 = scmp.ne.s32.totalorder %s185, %s186
      %p197 = scmp.eq.s32.totalorder %s25, 0
      %p198 = por %p196, %p197
      %p199 = scmp.ne.s32.totalorder %s185, %s186
      %p200 = scmp.eq.s32.totalorder %s26, 1
      %p201 = por %p199, %p200
      %p203 = scmp.ne.s32.totalorder %s186, %s202
      %p204 = scmp.eq.s32.totalorder %s26, 0
      %p205 = por %p203, %p204
      %s206 = ssub.s32 %s27, %s39
      %s207 = ssub.s32 %s28, %s35
      %s208 = sor.u32 %s206, %s207
      %p209 = scmp.eq.s32.totalorder %s208, 0
      %s211 = sadd.s32 %s210, 1
      %s212 = scalar_select %p209, %s210, %s211
      %p215 = pneg %p209
      %p216 = scmp.eq.s32.totalorder %s20, 1
      %p217 = por %p215, %p216
      %p218 = scmp.ne.s32.totalorder %s210, %s213
      %p219 = scmp.eq.s32.totalorder %s20, 0
      %p220 = por %p218, %p219
      %p221 = scmp.ne.s32.totalorder %s210, %s213
      %p222 = scmp.eq.s32.totalorder %s25, 1
      %p223 = por %p221, %p222
      %p224 = scmp.ne.s32.totalorder %s213, %s214
      %p225 = scmp.eq.s32.totalorder %s25, 0
      %p226 = por %p224, %p225
      %p227 = scmp.ne.s32.totalorder %s213, %s214
      %p228 = scmp.eq.s32.totalorder %s26, 1
      %p229 = por %p227, %p228
      %p231 = scmp.ne.s32.totalorder %s214, %s230
      %p232 = scmp.eq.s32.totalorder %s26, 0
      %p233 = por %p231, %p232
      %p234 = scmp.le.s32.totalorder 1, %s20
      %p235 = scmp.lt.s32.totalorder %s20, 3
      %p236 = pnand %p234, %p235
      %p237 = pneg %p236
      // Predicated region
      $region9: #{attention_block.1} parent=5 // pred_check
        _
      $region10: #{attention_block.1} parent=5 // pred_check_branch
        %239 = sbr.rel (%p236) target = $region12
      $region11: #{attention_block.1} parent=5 // pred_region
        %s240 = ssub.s32 %s20, 1
        // Predicated region
        $region13: #{attention_block.1} parent=11 // pred_check
          %p241 = pneg %p107
        $region14: #{attention_block.1} parent=11 // pred_check_branch
          %243 = sbr.rel (%p241) target = $region16
        $region15: #{attention_block.1} parent=11 // pred_region
          _
        $region16: #{attention_block.1} parent=11 // pred_fallthru
          _
        // Predicated region
        $region17: #{attention_block.1} parent=11 // pred_check
          %p244 = pneg %p128
        $region18: #{attention_block.1} parent=11 // pred_check_branch
          %246 = sbr.rel (%p244) target = $region20
        $region19: #{attention_block.1} parent=11 // pred_region
          _
        $region20: #{attention_block.1} parent=11 // pred_fallthru
          _
        // Predicated region
        $region21: #{attention_block.1} parent=11 // pred_check
          %p247 = pneg %p149
        $region22: #{attention_block.1} parent=11 // pred_check_branch
          %249 = sbr.rel (%p247) target = $region24
        $region23: #{attention_block.1} parent=11 // pred_region
          _
        $region24: #{attention_block.1} parent=11 // pred_fallthru
          _
        // Predicated region
        $region25: #{attention_block.1} parent=11 // pred_check
          %p250 = pneg %p170
        $region26: #{attention_block.1} parent=11 // pred_check_branch
          %252 = sbr.rel (%p250) target = $region28
        $region27: #{attention_block.1} parent=11 // pred_region
          _
        $region28: #{attention_block.1} parent=11 // pred_fallthru
          _
      $region12: #{attention_block.1} parent=5 // pred_fallthru
        _
      %p253 = scmp.lt.s32.totalorder %s20, 2
      // Predicated region
      $region29: #{attention_block.1} parent=5 // pred_check
        %p254 = pneg %p253
      $region30: #{attention_block.1} parent=5 // pred_check_branch
        %256 = sbr.rel (%p254) target = $region32
      $region31: #{attention_block.1} parent=5 // pred_region
        // Predicated region
        $region33: #{attention_block.1} parent=31 // pred_check
          %p257 = pneg %p52
        $region34: #{attention_block.1} parent=31 // pred_check_branch
          %259 = sbr.rel (%p257) target = $region36
        $region35: #{attention_block.1} parent=31 // pred_region
          %p260 = scmp.lt.s32.totalorder %s27, 1
          %s261 = scalar_select %p260, %s27, 1
          %s262 = smul.addr %s261, 8
          %s263 = scalar_lea.vmem %s0, %s262
        $region36: #{attention_block.1} parent=31 // pred_fallthru
          _
        // Predicated region
        $region37: #{attention_block.1} parent=31 // pred_check
          %p264 = pneg %p80
        $region38: #{attention_block.1} parent=31 // pred_check_branch
          %266 = sbr.rel (%p264) target = $region40
        $region39: #{attention_block.1} parent=31 // pred_region
          %p267 = scmp.lt.s32.totalorder %s27, 1
          %s268 = scalar_select %p267, %s27, 1
          %p269 = scmp.lt.s32.totalorder %s28, 0
          %s270 = scalar_select %p269, %s28, 0
          %s271 = sadd.s32 %s270, %s268
          %s272 = smul.addr %s271, 8
          %s273 = scalar_lea.vmem %s1, %s272
        $region40: #{attention_block.1} parent=31 // pred_fallthru
          _
      $region32: #{attention_block.1} parent=5 // pred_fallthru
        _
      %p274 = scmp.le.s32.totalorder 1, %s20
      %p275 = scmp.lt.s32.totalorder %s20, 3
      %p276 = pnand %p274, %p275
      %p277 = pneg %p276
      // Predicated region
      $region41: #{attention_block.1} parent=5 // pred_check
        _
      $region42: #{attention_block.1} parent=5 // pred_check_branch
        %279 = sbr.rel (%p276) target = $region44
      $region43: #{attention_block.1} parent=5 // pred_region
        %s280 = ssub.s32 %s20, 1
        %p281 = scmp.lt.s32.totalorder %s29, 1
        %s282 = scalar_select %p281, %s29, 1
        %s283 = smul.addr %s282, 8
        %s284 = scalar_lea.vmem %s0, %s283
        %p285 = pneg %p58
        %p286 = pneg %p55
        %p287 = scmp.lt.s32.totalorder %s29, 1
        %s288 = scalar_select %p287, %s29, 1
        %p289 = scmp.lt.s32.totalorder %s30, 0
        %s290 = scalar_select %p289, %s30, 0
        %s291 = sadd.s32 %s290, %s288
        %s292 = smul.addr %s291, 8
        %s293 = scalar_lea.vmem %s1, %s292
        %p294 = pneg %p86
        %p295 = pneg %p83
        %p296 = pneg %p107
        %p297 = pneg %p104
        %p298 = pneg %p128
        %p299 = pneg %p125
        %p300 = pneg %p149
        %p301 = pneg %p146
        %p302 = pneg %p170
        %p303 = pneg %p167
        %p304 = pneg %p198
        %p305 = pneg %p195
        %s306 = sand.u32 %s185, 1
        %s307 = scalar_lea.sflag [#allocation5], %s306
        %s308 = sand.u32 %s185, 1
        %s309 = smul.addr %s308, 8
        %s310 = scalar_lea.vmem [#allocation4], %s309
        %p311 = pneg %p226
        %p312 = pneg %p223
        %s313 = sand.u32 %s213, 1
        %s314 = scalar_lea.sflag [#allocation7], %s313
        %s315 = sand.u32 %s213, 1
        %s316 = smul.addr %s315, 4
        %s317 = scalar_lea.vmem [#allocation6], %s316
        %p318 = scmp.lt.s32.totalorder %s29, 1
        %s319 = scalar_select %p318, %s29, 1
        %s320 = smul.addr %s319, 8
        %s321 = scalar_lea.vmem %s0, %s320
        %p322 = scmp.lt.s32.totalorder %s29, 1
        %s323 = scalar_select %p322, %s29, 1
        %p324 = scmp.lt.s32.totalorder %s30, 0
        %s325 = scalar_select %p324, %s30, 0
        %s326 = sadd.s32 %s325, %s323
        %s327 = smul.addr %s326, 8
        %s328 = scalar_lea.vmem %s1, %s327
        %p330 = scmp.eq.s32.totalorder %s30, 0
        // Predicated region
        $region45: #{attention_block.1} parent=43 // pred_check
          %p331 = pneg %p330
        $region46: #{attention_block.1} parent=43 // pred_check_branch
          %333 = sbr.rel (%p331) target = $region48
        $region47: #{attention_block.1} parent=43 // pred_region
          %v334 = vld [vmem:[%s321] sm:$0xff]
          %v335 = vpack.c.bf16 %v334, %v334
          %v336 = vld [vmem:[%s4] sm:$0xff]
          %v337 = vld [vmem:[%s4 + $0x8] sm:$0xff]
          %v338 = vld [vmem:[%s4 + $0x10] sm:$0xff]
          %v339 = vld [vmem:[%s4 + $0x18] sm:$0xff]
          %v340 = vld [vmem:[%s5] sm:$0x3]
          %v342 = vlaneseq
          %v343 = vshrl.u32 %v342, 7
          %v344 = vsub.s32 0, %v343
          %v345 = vrot.slane %v340, %v344
          %v346 = vlaneseq
          %v347 = vshrl.u32 %v346, 7
          %v348 = vsub.s32 1, %v347
          %v349 = vrot.slane %v340, %v348
          %v356 = vunpack.c.l.b16 %v336
          %v357 = vunpack.c.h.b16 %v336
          %v358 = vunpack.c.l.b16 %v337
          %v359 = vunpack.c.h.b16 %v337
          %v360 = vunpack.c.l.b16 %v338
          %v361 = vunpack.c.h.b16 %v338
          %v362 = vunpack.c.l.b16 %v339
          %v363 = vunpack.c.h.b16 %v339
          %v364 = vpack.c.b16 %v358, %v356
          %v365 = vpack.c.b16 %v359, %v357
          %v366 = vpack.c.b16 %v362, %v360
          %v367 = vpack.c.b16 %v363, %v361
          %vm372 = vcmask 261120
          %v374 = vsel %vm372, %v335, 0
          %376 = vmatprep.subr.bf16.mxu0 0
          %377 = vmatpush1.bf16.msra.mxu0 0
          %378 = vmatprep.subr.bf16.mxu0 0
          %379 = vmatpush1.bf16.msra.mxu0 0
          %380 = vmatprep.subr.bf16.mxu0 0
          %381 = vmatpush1.bf16.msra.mxu0 0
          %382 = vmatprep.subr.bf16.mxu0 0
          %383 = vmatpush1.bf16.msra.mxu0 0
          %384 = vmatprep.subr.bf16.mxu0 0
          %385 = vmatpush1.bf16.msra.mxu0 0
          %386 = vmatprep.subr.bf16.mxu0 0
          %387 = vmatpush1.bf16.msra.mxu0 0
          %388 = vmatprep.subr.bf16.mxu0 %v367
          %389 = vmatpush1.bf16.msra.mxu0 %v366
          %390 = vmatprep.subr.bf16.mxu0 %v365
          %391 = vmatpush1.bf16.msra.mxu0 %v364
          %392 = vmatprep.subr.bf16.mxu0 0
          %393 = vmatpush2.bf16.msra.mxu0 0
          %394 = vmatprep.subr.bf16.mxu0 0
          %395 = vmatpush2.bf16.msra.mxu0 0
          %396 = vmatprep.subr.bf16.mxu0 0
          %397 = vmatpush2.bf16.msra.mxu0 0
          %398 = vmatprep.subr.bf16.mxu0 0
          %399 = vmatpush2.bf16.msra.mxu0 0
          %400 = vmatprep.subr.bf16.mxu0 0
          %401 = vmatpush2.bf16.msra.mxu0 0
          %402 = vmatprep.subr.bf16.mxu0 0
          %403 = vmatpush2.bf16.msra.mxu0 0
          %404 = vmatprep.subr.bf16.mxu0 0
          %405 = vmatpush2.bf16.msra.mxu0 0
          %406 = vmatprep.subr.bf16.mxu0 0
          %407 = vmatpush2.bf16.msra.mxu0 0
          %408 = vmatprep.mubr.bf16.mxu0 0
          %409 = vmatmul.mubr.bf16.gmra.mxu0 %v374
          %v410 = vpop.f32.mrf.mxu0
          %v411 = vadd.f32 %v345, %v410
          %v412 = vpop.f32.mrf.mxu0
          %v413 = vadd.f32 %v349, %v412
          %v414 = vpop.f32.mrf.mxu0
          %v415 = vpop.f32.mrf.mxu0
          %416 = vdwg.mxu0
          %v417 = vpack.c.bf16 %v411, %v411
          %v418 = vpack.c.bf16 %v413, %v413
          %419 = vst [vmem:[#allocation2] sm:$0xf] %v417
          %420 = vst [vmem:[#allocation3] sm:$0xf] %v418
        $region48: #{attention_block.1} parent=43 // pred_fallthru
          _
        %v421 = vld [vmem:[%s328] sm:$0xff]
        %v422 = vpack.c.bf16 %v421, %v421
        %v423 = vld [vmem:[%s2] sm:$0xf]
        %v424 = vld [vmem:[%s2 + $0x4] sm:$0xf]
        %v425 = vld [vmem:[%s2 + $0x8] sm:$0xf]
        %v426 = vld [vmem:[%s2 + $0xc] sm:$0xf]
        %v427 = vld [vmem:[%s3] sm:$0x1]
        %v429 = vlaneseq
        %v430 = vshrl.u32 %v429, 7
        %v431 = vsub.s32 0, %v430
        %v432 = vrot.slane %v427, %v431
        %v438 = vunpack.c.l.b16 %v423
        %v439 = vunpack.c.l.b16 %v424
        %v440 = vunpack.c.l.b16 %v425
        %v441 = vunpack.c.l.b16 %v426
        %v442 = vpack.c.b16 %v439, %v438
        %v443 = vpack.c.b16 %v441, %v440
        %vm446 = vcmask 261120
        %v448 = vsel %vm446, %v422, 0
        %450 = vmatprep.subr.bf16.mxu0 0
        %451 = vmatpush1.bf16.msra.mxu0 0
        %452 = vmatprep.subr.bf16.mxu0 0
        %453 = vmatpush1.bf16.msra.mxu0 0
        %454 = vmatprep.subr.bf16.mxu0 0
        %455 = vmatpush1.bf16.msra.mxu0 0
        %456 = vmatprep.subr.bf16.mxu0 0
        %457 = vmatpush1.bf16.msra.mxu0 0
        %458 = vmatprep.subr.bf16.mxu0 0
        %459 = vmatpush1.bf16.msra.mxu0 0
        %460 = vmatprep.subr.bf16.mxu0 0
        %461 = vmatpush1.bf16.msra.mxu0 0
        %462 = vmatprep.subr.bf16.mxu0 0
        %463 = vmatpush1.bf16.msra.mxu0 %v443
        %464 = vmatprep.subr.bf16.mxu0 0
        %465 = vmatpush1.bf16.msra.mxu0 %v442
        %466 = vmatprep.subr.bf16.mxu0 0
        %467 = vmatpush2.bf16.msra.mxu0 0
        %468 = vmatprep.subr.bf16.mxu0 0
        %469 = vmatpush2.bf16.msra.mxu0 0
        %470 = vmatprep.subr.bf16.mxu0 0
        %471 = vmatpush2.bf16.msra.mxu0 0
        %472 = vmatprep.subr.bf16.mxu0 0
        %473 = vmatpush2.bf16.msra.mxu0 0
        %474 = vmatprep.subr.bf16.mxu0 0
        %475 = vmatpush2.bf16.msra.mxu0 0
        %476 = vmatprep.subr.bf16.mxu0 0
        %477 = vmatpush2.bf16.msra.mxu0 0
        %478 = vmatprep.subr.bf16.mxu0 0
        %479 = vmatpush2.bf16.msra.mxu0 0
        %480 = vmatprep.subr.bf16.mxu0 0
        %481 = vmatpush2.bf16.msra.mxu0 0
        %482 = vmatprep.mubr.bf16.mxu0 0
        %483 = vmatmul.mubr.bf16.gmra.mxu0 %v448
        %v484 = vpop.f32.mrf.mxu0
        %v485 = vadd.f32 %v432, %v484
        %v486 = vpop.f32.mrf.mxu0
        %v487 = vpop.f32.mrf.mxu0
        %v488 = vpop.f32.mrf.mxu0
        %489 = vdwg.mxu0
        %v490 = vpack.c.bf16 %v485, %v485
        %v491 = vld [vmem:[#allocation2] sm:$0xf]
        %492 = vmatprep.subr.bf16.mxu0 0
        %493 = vmatpush1.bf16.xpose.msra.mxu0 0
        %494 = vmatprep.subr.bf16.mxu0 0
        %495 = vmatpush1.bf16.xpose.msra.mxu0 0
        %496 = vmatprep.subr.bf16.mxu0 0
        %497 = vmatpush1.bf16.xpose.msra.mxu0 0
        %498 = vmatprep.subr.bf16.mxu0 0
        %499 = vmatpush1.bf16.xpose.msra.mxu0 0
        %500 = vmatprep.subr.bf16.mxu0 0
        %501 = vmatpush1.bf16.xpose.msra.mxu0 0
        %502 = vmatprep.subr.bf16.mxu0 0
        %503 = vmatpush1.bf16.xpose.msra.mxu0 0
        %504 = vmatprep.subr.bf16.mxu0 0
        %505 = vmatpush1.bf16.xpose.msra.mxu0 0
        %506 = vmatprep.subr.bf16.mxu0 0
        %507 = vmatpush1.bf16.xpose.msra.mxu0 %v491
        %508 = vmatprep.subr.bf16.mxu0 0
        %509 = vmatpush2.bf16.xpose.msra.mxu0 0
        %510 = vmatprep.subr.bf16.mxu0 0
        %511 = vmatpush2.bf16.xpose.msra.mxu0 0
        %512 = vmatprep.subr.bf16.mxu0 0
        %513 = vmatpush2.bf16.xpose.msra.mxu0 0
        %514 = vmatprep.subr.bf16.mxu0 0
        %515 = vmatpush2.bf16.xpose.msra.mxu0 0
        %516 = vmatprep.subr.bf16.mxu0 0
        %517 = vmatpush2.bf16.xpose.msra.mxu0 0
        %518 = vmatprep.subr.bf16.mxu0 0
        %519 = vmatpush2.bf16.xpose.msra.mxu0 0
        %520 = vmatprep.subr.bf16.mxu0 0
        %521 = vmatpush2.bf16.xpose.msra.mxu0 0
        %522 = vmatprep.subr.bf16.mxu0 0
        %523 = vmatpush2.bf16.xpose.msra.mxu0 0
        %524 = vmatprep.mubr.bf16.mxu0 0
        %525 = vmatmul.mubr.bf16.gmra.mxu0 %v490
        %v526 = vpop.f32.mrf.mxu0
        %v527 = vadd.f32 0.0, %v526
        %v528 = vpop.f32.mrf.mxu0
        %v529 = vpop.f32.mrf.mxu0
        %v530 = vpop.f32.mrf.mxu0
        %531 = vdwg.mxu0
        %vm532 = vcmask 64512
        %v533 = vsel %vm532, %v527, -inf
        %534 = vmax.xlane.f32.xlu0 %v533
        %v535 = vpop.xlane.xlu0 %534
        %v536 = vsub.f32 %v527, %v535
        %v537 = vmul.f32 %v536, 1.442695
        %v538 = vpow.pop %v537
        %v539 = vsel %vm532, %v538, 0.0
        %540 = vadd.xlane.f32.xlu0 %v539
        %v541 = vpop.xlane.xlu0 %540
        %v542 = vrcp.pop %v541
        %v543 = vmul.f32 %v538, %v542
        %v544 = vpack.c.bf16 %v543, %v543
        %v545 = vld [vmem:[#allocation3] sm:$0xf]
        %v547 = vsel %vm532, %v544, 0
        %vm549 = vcmask 1043456
        %v551 = vsel %vm549, %v545, 0
        %553 = vmatprep.subr.bf16.mxu0 0
        %554 = vmatpush1.bf16.msra.mxu0 0
        %555 = vmatprep.subr.bf16.mxu0 0
        %556 = vmatpush1.bf16.msra.mxu0 0
        %557 = vmatprep.subr.bf16.mxu0 0
        %558 = vmatpush1.bf16.msra.mxu0 0
        %559 = vmatprep.subr.bf16.mxu0 0
        %560 = vmatpush1.bf16.msra.mxu0 0
        %561 = vmatprep.subr.bf16.mxu0 0
        %562 = vmatpush1.bf16.msra.mxu0 0
        %563 = vmatprep.subr.bf16.mxu0 0
        %564 = vmatpush1.bf16.msra.mxu0 0
        %565 = vmatprep.subr.bf16.mxu0 0
        %566 = vmatpush1.bf16.msra.mxu0 0
        %567 = vmatprep.subr.bf16.mxu0 0
        %568 = vmatpush1.bf16.msra.mxu0 %v551
        %569 = vmatprep.subr.bf16.mxu0 0
        %570 = vmatpush2.bf16.msra.mxu0 0
        %571 = vmatprep.subr.bf16.mxu0 0
        %572 = vmatpush2.bf16.msra.mxu0 0
        %573 = vmatprep.subr.bf16.mxu0 0
        %574 = vmatpush2.bf16.msra.mxu0 0
        %575 = vmatprep.subr.bf16.mxu0 0
        %576 = vmatpush2.bf16.msra.mxu0 0
        %577 = vmatprep.subr.bf16.mxu0 0
        %578 = vmatpush2.bf16.msra.mxu0 0
        %579 = vmatprep.subr.bf16.mxu0 0
        %580 = vmatpush2.bf16.msra.mxu0 0
        %581 = vmatprep.subr.bf16.mxu0 0
        %582 = vmatpush2.bf16.msra.mxu0 0
        %583 = vmatprep.subr.bf16.mxu0 0
        %584 = vmatpush2.bf16.msra.mxu0 0
        %585 = vmatprep.mubr.bf16.mxu0 0
        %586 = vmatmul.mubr.bf16.gmra.mxu0 %v547
        %v587 = vpop.f32.mrf.mxu0
        %v588 = vadd.f32 0.0, %v587
        %v589 = vpop.f32.mrf.mxu0
        %v590 = vpop.f32.mrf.mxu0
        %v591 = vpop.f32.mrf.mxu0
        %592 = vdwg.mxu0
        %593 = vst [vmem:[%s310] sm:$0xff] %v588
        %vm594 = vcmask 60416
        %595 = vst.msk [vmem:[%s317] sm:$0xf] %vm594, %v544
        %s596 = sand.u32 %s185, 1
        %s597 = scalar_lea.sflag [#allocation5], %s596
        %s598 = sand.u32 %s185, 1
        %s599 = smul.addr %s598, 8
        %s600 = scalar_lea.vmem [#allocation4], %s599
        %s601 = sand.u32 %s213, 1
        %s602 = scalar_lea.sflag [#allocation7], %s601
        %s603 = sand.u32 %s213, 1
        %s604 = smul.addr %s603, 4
        %s605 = scalar_lea.vmem [#allocation6], %s604
        // Predicated region
        $region49: #{attention_block.1} parent=43 // pred_check
          %p606 = pneg %p195
        $region50: #{attention_block.1} parent=43 // pred_check_branch
          %608 = sbr.rel (%p606) target = $region52
        $region51: #{attention_block.1} parent=43 // pred_region
          %s610 = ssub.s32 128, 128
          %611 = vsyncadd %s597, %s610
          %s612 = sadd.s32 %s30, %s29
          %s613 = smul.addr %s612, 128
          %s614 = scalar_lea.hbm %s6, %s613
          %s616 = sshll.u32 %s600, 4
          %s617 = int_to_ptr.vmem [resolvable:$true] %s616
          %619 = dma.vmem_to_hbm [thread:$0]  %s617, 128, %s614, %s597
        $region52: #{attention_block.1} parent=43 // pred_fallthru
          _
        // Predicated region
        $region53: #{attention_block.1} parent=43 // pred_check
          %p620 = pneg %p223
        $region54: #{attention_block.1} parent=43 // pred_check_branch
          %622 = sbr.rel (%p620) target = $region56
        $region55: #{attention_block.1} parent=43 // pred_region
          %s624 = ssub.s32 64, 64
          %625 = vsyncadd %s602, %s624
          %s626 = sadd.s32 %s30, %s29
          %s627 = smul.addr %s626, 64
          %s628 = scalar_lea.hbm %s7, %s627
          %s630 = sshll.u32 %s605, 4
          %s631 = int_to_ptr.vmem [resolvable:$true] %s630
          %633 = dma.vmem_to_hbm [thread:$0]  %s631, 64, %s628, %s602
        $region56: #{attention_block.1} parent=43 // pred_fallthru
          _
      $region44: #{attention_block.1} parent=5 // pred_fallthru
        _
      %p634 = scmp.le.s32.totalorder 2, %s20
      // Predicated region
      $region57: #{attention_block.1} parent=5 // pred_check
        %p635 = pneg %p634
      $region58: #{attention_block.1} parent=5 // pred_check_branch
        %637 = sbr.rel (%p635) target = $region60
      $region59: #{attention_block.1} parent=5 // pred_region
        %s638 = ssub.s32 %s20, 2
        // Predicated region
        $region61: #{attention_block.1} parent=59 // pred_check
          %p639 = pneg %p201
        $region62: #{attention_block.1} parent=59 // pred_check_branch
          %641 = sbr.rel (%p639) target = $region64
        $region63: #{attention_block.1} parent=59 // pred_region
          %s642 = sand.u32 %s186, 1
          %s643 = scalar_lea.sflag [#allocation5], %s642
          %s644 = sand.u32 %s186, 1
          %s645 = smul.addr %s644, 8
          %s646 = scalar_lea.vmem [#allocation4], %s645
          %647 = dma.done %s643, 128
        $region64: #{attention_block.1} parent=59 // pred_fallthru
          _
        // Predicated region
        $region65: #{attention_block.1} parent=59 // pred_check
          %p648 = pneg %p229
        $region66: #{attention_block.1} parent=59 // pred_check_branch
          %650 = sbr.rel (%p648) target = $region68
        $region67: #{attention_block.1} parent=59 // pred_region
          %s651 = sand.u32 %s214, 1
          %s652 = scalar_lea.sflag [#allocation7], %s651
          %s653 = sand.u32 %s214, 1
          %s654 = smul.addr %s653, 4
          %s655 = scalar_lea.vmem [#allocation6], %s654
          %656 = dma.done %s652, 64
        $region68: #{attention_block.1} parent=59 // pred_fallthru
          _
      $region60: #{attention_block.1} parent=5 // pred_fallthru
        _
    $region6: #{attention_block.1} parent=1 // loop_footer
      %s24 = sadd.s32 1, %s20
    $region7: #{attention_block.1} parent=1 // loop_footer_branch
      %19 = sbr.rel target = $region3
    $region8: #{attention_block.1} parent=1 // loop_exit
      _
    %657 = vsyncpa [#allocation5], 1
    %s658 = scalar_lea.sflag [#allocation5], 1
    %659 = vsyncpa %s658, 1
    %660 = vsyncpa [#allocation7], 1
    %s661 = scalar_lea.sflag [#allocation7], 1
    %662 = vsyncpa %s661, 1

</llo_original>
